<compile_context>
chip_gen: v5e
topology: v5e:2x2
jax: 0.10.0
libtpu: 0.0.40
codegen_flags: <defaults>
</compile_context>

<pallas_src>
import functools

import jax
import jax.numpy as jnp
from jax.experimental import pallas as pl
from jax.experimental.pallas import tpu as pltpu


def _round_up(x, m):
    return (x + m - 1) // m * m


def _num_tensorcores():
    """Best-effort TensorCores-per-device count (v7x: 2; v4/v5p megacore: 2; else 1)."""
    try:
        dev = jax.devices()[0]
        n = getattr(dev, "num_cores", None)
        if n:
            return max(int(n), 1)
        kind = str(getattr(dev, "device_kind", "")).lower()
        if any(tag in kind for tag in ("v4", "v5p", "v7", "7x")):
            return 2
    except Exception:
        pass
    return 1


def _pick_block_b(B, dtype, n_cores):
    """Batch tile: as large as possible (<= 2048 rows) while keeping >= n_cores grid steps."""
    itemsize = jnp.dtype(dtype).itemsize
    sub = 8 if itemsize >= 4 else (16 if itemsize == 2 else 32)  # sublane granularity
    B_eff = max(B, sub)
    # HBM/step-overhead bound kernel: big tiles amortize the ~0.35us/step overhead, and even a
    # 2048-row f32 tile stays far under every generation's scoped VMEM default at F=128.
    cap = 2048
    if n_cores > 1:
        # Keep >= n_cores "parallel" steps so every TensorCore gets at least one tile (v7x).
        cap = max(sub, min(cap, _round_up(pl.cdiv(B_eff, n_cores), sub)))
    if B_eff <= cap:
        return _round_up(B_eff, sub)
    # Split into (near-)even tiles <= cap so padding waste stays minimal.
    n_tiles = pl.cdiv(B_eff, cap)
    return _round_up(pl.cdiv(B_eff, n_tiles), sub)


def _make_kernel(emit_spe, mxu_bf16):
    def _dot(a, b):
        if mxu_bf16:
            a = a.astype(jnp.bfloat16)
            b = b.astype(jnp.bfloat16)
        return jnp.dot(a, b, preferred_element_type=jnp.float32)

    def kernel(x_ref, w1_ref, b1_ref, w2_ref, b2_ref, w3_ref, b3_ref, *out_refs):
        if emit_spe:
            spe_ref, out_ref = out_refs
        else:
            (out_ref,) = out_refs

        x = x_ref[...]  # native dtype; _dot handles any MXU-side cast

        # fc1 + ReLU (f32 accumulation on the MXU, f32 elementwise epilogue -> v5e-safe)
        spe = jnp.maximum(_dot(x, w1_ref[...]) + b1_ref[...].astype(jnp.float32), 0.0)
        if emit_spe:
            spe_ref[...] = spe.astype(spe_ref.dtype)

        # contrastive MLP head: Linear -> ReLU -> Linear
        h = jnp.maximum(_dot(spe, w2_ref[...]) + b2_ref[...].astype(jnp.float32), 0.0)
        o = _dot(h, w3_ref[...]) + b3_ref[...].astype(jnp.float32)

        # F.normalize(o, dim=-1) == o / max(||o||, 1e-12);
        # rsqrt(max(sumsq, 1e-24)) is exactly the same quantity (eps squared), on the EUP.
        sumsq = jnp.sum(o * o, axis=-1, keepdims=True)
        inv = jax.lax.rsqrt(jnp.maximum(sumsq, 1e-24))
        out_ref[...] = (o * inv).astype(out_ref.dtype)

    return kernel


@functools.partial(jax.jit, static_argnames=("block_b", "return_spe", "mxu_bf16"))
def _forward(spe_x, w1, b1, w2, b2, w3, b3, *, block_b, return_spe, mxu_bf16):
    B, N = spe_x.shape
    F_dim = w1.shape[1]

    # Pad batch to a tile boundary (padded rows are discarded at the end).
    B_pad = _round_up(B, block_b)
    x = spe_x if B_pad == B else jnp.pad(spe_x, ((0, B_pad - B), (0, 0)))

    # biases carried as (1, F) rows for clean lane-major broadcasting
    b1r = b1.reshape(1, -1)
    b2r = b2.reshape(1, -1)
    b3r = b3.reshape(1, -1)

    grid = (B_pad // block_b,)

    in_item = jnp.dtype(spe_x.dtype).itemsize
    w_item = jnp.dtype(w1.dtype).itemsize
    n_outs = 2 if return_spe else 1

    cost = pl.CostEstimate(
        flops=2 * B_pad * (N * F_dim + 2 * F_dim * F_dim),
        transcendentals=B_pad,  # one rsqrt per row
        bytes_accessed=(in_item * B_pad * N
                        + in_item * n_outs * B_pad * F_dim
                        + w_item * (N * F_dim + 2 * F_dim * F_dim + 3 * F_dim)),
    )

    # VMEM guard (cheap insurance for large features_dim, esp. on v7x's 64 MiB VMEM):
    # double-buffered activation tiles + (double-buffered) resident weights + f32 intermediates.
    vmem_needed = (2 * block_b * (N + n_outs * F_dim) * in_item
                   + 2 * (N * F_dim + 2 * F_dim * F_dim + 3 * F_dim) * w_item
                   + 4 * block_b * 3 * F_dim)
    cp_kwargs = dict(dimension_semantics=("parallel",))
    if vmem_needed > 24 * 1024 * 1024:
        cp_kwargs["vmem_limit_bytes"] = int(min(vmem_needed * 1.25, 100 * 1024 * 1024))

    act_spec = pl.BlockSpec((block_b, F_dim), lambda i: (i, 0))
    out_shapes = []
    out_specs = []
    if return_spe:
        out_shapes.append(jax.ShapeDtypeStruct((B_pad, F_dim), spe_x.dtype))
        out_specs.append(act_spec)
    out_shapes.append(jax.ShapeDtypeStruct((B_pad, F_dim), spe_x.dtype))
    out_specs.append(act_spec)

    results = pl.pallas_call(
        _make_kernel(return_spe, mxu_bf16),
        out_shape=tuple(out_shapes),
        grid_spec=pltpu.PrefetchScalarGridSpec(
            num_scalar_prefetch=0,
            grid=grid,
            in_specs=[
                pl.BlockSpec((block_b, N), lambda i: (i, 0)),    # spe_x tile
                pl.BlockSpec((N, F_dim), lambda i: (0, 0)),      # W1 (resident)
                pl.BlockSpec((1, F_dim), lambda i: (0, 0)),      # b1
                pl.BlockSpec((F_dim, F_dim), lambda i: (0, 0)),  # W2
                pl.BlockSpec((1, F_dim), lambda i: (0, 0)),      # b2
                pl.BlockSpec((F_dim, F_dim), lambda i: (0, 0)),  # W3
                pl.BlockSpec((1, F_dim), lambda i: (0, 0)),      # b3
            ],
            out_specs=out_specs,
        ),
        compiler_params=pltpu.CompilerParams(**cp_kwargs),
        cost_estimate=cost,
    )(x, w1, b1r, w2, b2r, w3, b3r)

    results = tuple(r[:B] for r in results) if B_pad != B else tuple(results)
    if return_spe:
        return results[0], results[1]
    return results[0]


def spectral_model_forward(spe_x, w1, b1, w2, b2, w3, b3, *,
                           block_b=None, return_spe=True, mxu_bf16=None):
    """SpectralModel.forward. (The PyTorch forward's `i` argument is unused; backbone unused.)

    mxu_bf16=None (auto): bf16 inputs use the bf16 MXU path natively; f32 inputs keep exact
    f32 matmul parity unless the caller opts into bf16 MXU operands (f32 accumulation kept).
    return_spe=False skips the spe HBM writeback when only `out` is consumed.
    """
    if mxu_bf16 is None:
        mxu_bf16 = jnp.dtype(spe_x.dtype) == jnp.dtype(jnp.bfloat16)
    if block_b is None:
        block_b = _pick_block_b(spe_x.shape[0], spe_x.dtype, _num_tensorcores())
    return _forward(spe_x, w1, b1, w2, b2, w3, b3,
                    block_b=int(block_b), return_spe=bool(return_spe),
                    mxu_bf16=bool(mxu_bf16))


def _init_linear(key, fan_in, fan_out, dtype=jnp.float32):
    # deterministic init (PyTorch-style uniform(-1/sqrt(fan_in), 1/sqrt(fan_in)))
    kw, kb = jax.random.split(key)
    bound = 1.0 / jnp.sqrt(fan_in)
    w = jax.random.uniform(kw, (fan_in, fan_out), dtype, -bound, bound)
    b = jax.random.uniform(kb, (fan_out,), dtype, -bound, bound)
    return w, b


def _reference(spe_x, w1, b1, w2, b2, w3, b3):
    spe_x, w1, b1, w2, b2, w3, b3 = [a.astype(jnp.float32)
                                     for a in (spe_x, w1, b1, w2, b2, w3, b3)]
    spe = jnp.maximum(spe_x @ w1 + b1, 0.0)
    h = jnp.maximum(spe @ w2 + b2, 0.0)
    o = h @ w3 + b3
    norm = jnp.sqrt(jnp.sum(o * o, axis=-1, keepdims=True))
    out = o / jnp.maximum(norm, 1e-12)
    return spe, out


if __name__ == "__main__":
    # small shapes consistent with the module defaults: n_feature=200, features_dim=128
    n_feature = 200
    features_dim = 128

    key = jax.random.PRNGKey(0)
    k_x, k1, k2, k3 = jax.random.split(key, 4)

    w1, b1 = _init_linear(k1, n_feature, features_dim)     # fc1
    w2, b2 = _init_linear(k2, features_dim, features_dim)  # head linear 1
    w3, b3 = _init_linear(k3, features_dim, features_dim)  # head linear 2

    # case 1: f32, auto tile, exact-parity (f32 MXU) path
    spe_x = jax.random.normal(k_x, (64, n_feature), jnp.float32)
    spe, out = spectral_model_forward(spe_x, w1, b1, w2, b2, w3, b3)
    jax.block_until_ready((spe, out))
    spe_r, out_r = _reference(spe_x, w1, b1, w2, b2, w3, b3)
    assert jnp.allclose(spe, spe_r, atol=1e-4, rtol=1e-4)
    assert jnp.allclose(out, out_r, atol=1e-4, rtol=1e-4)

    # case 2: non-divisible batch + explicit small tile -> exercises padding and a multi-step grid
    spe_x2 = jax.random.normal(k_x, (37, n_feature), jnp.float32)
    spe2, out2 = spectral_model_forward(spe_x2, w1, b1, w2, b2, w3, b3, block_b=16)
    jax.block_until_ready((spe2, out2))
    spe2_r, out2_r = _reference(spe_x2, w1, b1, w2, b2, w3, b3)
    assert spe2.shape == (37, features_dim) and out2.shape == (37, features_dim)
    assert jnp.allclose(spe2, spe2_r, atol=1e-4, rtol=1e-4)
    assert jnp.allclose(out2, out2_r, atol=1e-4, rtol=1e-4)

    # case 3: out-only variant (skips spe writeback)
    out3 = spectral_model_forward(spe_x, w1, b1, w2, b2, w3, b3, return_spe=False)
    jax.block_until_ready(out3)
    assert jnp.allclose(out3, out_r, atol=1e-4, rtol=1e-4)

    # case 4: bf16 MXU operands for f32 inputs (perf path; f32 accumulation) -> looser tolerance
    spe4, out4 = spectral_model_forward(spe_x, w1, b1, w2, b2, w3, b3, mxu_bf16=True)
    jax.block_until_ready((spe4, out4))
    assert jnp.allclose(spe4, spe_r, atol=2e-2, rtol=2e-2)
    assert jnp.allclose(out4, out_r, atol=2e-2, rtol=2e-2)

    # case 5: bf16 end-to-end (halves activation bytes on this memory-bound kernel)
    xb = spe_x.astype(jnp.bfloat16)
    w1b, b1b, w2b, b2b, w3b, b3b = [a.astype(jnp.bfloat16) for a in (w1, b1, w2, b2, w3, b3)]
    spe5, out5 = spectral_model_forward(xb, w1b, b1b, w2b, b2b, w3b, b3b)
    jax.block_until_ready((spe5, out5))
    spe5_r, out5_r = _reference(xb, w1b, b1b, w2b, b2b, w3b, b3b)
    assert jnp.allclose(spe5.astype(jnp.float32), spe5_r, atol=3e-2, rtol=3e-2)
    assert jnp.allclose(out5.astype(jnp.float32), out5_r, atol=3e-2, rtol=3e-2)

    print("KERNEL_OK")
</pallas_src>

<mosaic_0001>
module attributes {stable_mosaic.version = 11 : i64} {
  func.func @kernel(%arg0: i32, %arg1: memref<64x200xf32, #tpu.memory_space<vmem>>, %arg2: memref<200x128xf32, #tpu.memory_space<vmem>>, %arg3: memref<1x128xf32, #tpu.memory_space<vmem>>, %arg4: memref<128x128xf32, #tpu.memory_space<vmem>>, %arg5: memref<1x128xf32, #tpu.memory_space<vmem>>, %arg6: memref<128x128xf32, #tpu.memory_space<vmem>>, %arg7: memref<1x128xf32, #tpu.memory_space<vmem>>, %arg8: memref<64x128xf32, #tpu.memory_space<vmem>>, %arg9: memref<64x128xf32, #tpu.memory_space<vmem>>) attributes {dimension_semantics = [#tpu.dimension_semantics<parallel>], iteration_bounds = array<i64: 1>, scalar_prefetch = 0 : i64, scratch_operands = 0 : i64, tpu.core_type = #tpu.core_type<tc>, window_params = [{transform_indices = @transform_0, window_bounds = array<i64: 64, 200>}, {pipeline_mode = #tpu.pipeline_mode<synchronous>, transform_indices = @transform_1, window_bounds = array<i64: 200, 128>}, {pipeline_mode = #tpu.pipeline_mode<synchronous>, transform_indices = @transform_2, window_bounds = array<i64: 1, 128>}, {pipeline_mode = #tpu.pipeline_mode<synchronous>, transform_indices = @transform_3, window_bounds = array<i64: 128, 128>}, {pipeline_mode = #tpu.pipeline_mode<synchronous>, transform_indices = @transform_4, window_bounds = array<i64: 1, 128>}, {pipeline_mode = #tpu.pipeline_mode<synchronous>, transform_indices = @transform_5, window_bounds = array<i64: 128, 128>}, {pipeline_mode = #tpu.pipeline_mode<synchronous>, transform_indices = @transform_6, window_bounds = array<i64: 1, 128>}, {transform_indices = @transform_7, window_bounds = array<i64: 64, 128>}, {transform_indices = @transform_8, window_bounds = array<i64: 64, 128>}]} {
    %c0 = arith.constant 0 : index
    %c0_0 = arith.constant 0 : index
    %0 = vector.load %arg1[%c0, %c0_0] : memref<64x200xf32, #tpu.memory_space<vmem>>, vector<64x200xf32>
    %c0_1 = arith.constant 0 : index
    %c0_2 = arith.constant 0 : index
    %1 = vector.load %arg2[%c0_1, %c0_2] : memref<200x128xf32, #tpu.memory_space<vmem>>, vector<200x128xf32>
    %cst = arith.constant dense<0.000000e+00> : vector<64x128xf32>
    %2 = tpu.matmul %0, %1, %cst {dimension_numbers = #tpu.dot_dimension_numbers<[1], [0], [0], [1], [0, 0, 1, 1], [], []>} : vector<64x200xf32>, vector<200x128xf32>, vector<64x128xf32> -> vector<64x128xf32>
    %c0_3 = arith.constant 0 : index
    %c0_4 = arith.constant 0 : index
    %3 = vector.load %arg3[%c0_3, %c0_4] : memref<1x128xf32, #tpu.memory_space<vmem>>, vector<1x128xf32>
    %4 = vector.broadcast %3 : vector<1x128xf32> to vector<64x128xf32>
    %5 = arith.addf %2, %4 : vector<64x128xf32>
    %cst_5 = arith.constant 0.000000e+00 : f32
    %6 = vector.broadcast %cst_5 : f32 to vector<64x128xf32>
    %7 = arith.maximumf %5, %6 : vector<64x128xf32>
    %c0_6 = arith.constant 0 : index
    %c0_7 = arith.constant 0 : index
    %8 = vector.load %arg8[%c0_6, %c0_7] : memref<64x128xf32, #tpu.memory_space<vmem>>, vector<64x128xf32>
    tpu.vector_store %arg8[%c0_6, %c0_7], %7 {strides = array<i32>} : memref<64x128xf32, #tpu.memory_space<vmem>>, vector<64x128xf32>,
    %c0_8 = arith.constant 0 : index
    %c0_9 = arith.constant 0 : index
    %9 = vector.load %arg4[%c0_8, %c0_9] : memref<128x128xf32, #tpu.memory_space<vmem>>, vector<128x128xf32>
    %cst_10 = arith.constant dense<0.000000e+00> : vector<64x128xf32>
    %10 = tpu.matmul %7, %9, %cst_10 {dimension_numbers = #tpu.dot_dimension_numbers<[1], [0], [0], [1], [0, 0, 1, 1], [], []>} : vector<64x128xf32>, vector<128x128xf32>, vector<64x128xf32> -> vector<64x128xf32>
    %c0_11 = arith.constant 0 : index
    %c0_12 = arith.constant 0 : index
    %11 = vector.load %arg5[%c0_11, %c0_12] : memref<1x128xf32, #tpu.memory_space<vmem>>, vector<1x128xf32>
    %12 = vector.broadcast %11 : vector<1x128xf32> to vector<64x128xf32>
    %13 = arith.addf %10, %12 : vector<64x128xf32>
    %cst_13 = arith.constant 0.000000e+00 : f32
    %14 = vector.broadcast %cst_13 : f32 to vector<64x128xf32>
    %15 = arith.maximumf %13, %14 : vector<64x128xf32>
    %c0_14 = arith.constant 0 : index
    %c0_15 = arith.constant 0 : index
    %16 = vector.load %arg6[%c0_14, %c0_15] : memref<128x128xf32, #tpu.memory_space<vmem>>, vector<128x128xf32>
    %cst_16 = arith.constant dense<0.000000e+00> : vector<64x128xf32>
    %17 = tpu.matmul %15, %16, %cst_16 {dimension_numbers = #tpu.dot_dimension_numbers<[1], [0], [0], [1], [0, 0, 1, 1], [], []>} : vector<64x128xf32>, vector<128x128xf32>, vector<64x128xf32> -> vector<64x128xf32>
    %c0_17 = arith.constant 0 : index
    %c0_18 = arith.constant 0 : index
    %18 = vector.load %arg7[%c0_17, %c0_18] : memref<1x128xf32, #tpu.memory_space<vmem>>, vector<1x128xf32>
    %19 = vector.broadcast %18 : vector<1x128xf32> to vector<64x128xf32>
    %20 = arith.addf %17, %19 : vector<64x128xf32>
    %21 = arith.mulf %20, %20 : vector<64x128xf32>
    %cst_19 = arith.constant dense<0.000000e+00> : vector<64xf32>
    %22 = vector.multi_reduction <add>, %21, %cst_19 [1] : vector<64x128xf32> to vector<64xf32>
    %23 = vector.shape_cast %22 : vector<64xf32> to vector<64x1xf32>
    %cst_20 = arith.constant 1.000000e-24 : f32
    %24 = vector.broadcast %cst_20 : f32 to vector<64x1xf32>
    %25 = arith.maximumf %23, %24 : vector<64x1xf32>
    %26 = math.rsqrt %25 : vector<64x1xf32>
    %27 = vector.broadcast %26 : vector<64x1xf32> to vector<64x128xf32>
    %28 = arith.mulf %20, %27 : vector<64x128xf32>
    %c0_21 = arith.constant 0 : index
    %c0_22 = arith.constant 0 : index
    %29 = vector.load %arg9[%c0_21, %c0_22] : memref<64x128xf32, #tpu.memory_space<vmem>>, vector<64x128xf32>
    tpu.vector_store %arg9[%c0_21, %c0_22], %28 {strides = array<i32>} : memref<64x128xf32, #tpu.memory_space<vmem>>, vector<64x128xf32>,
    return
  }
  func.func @transform_0(%arg0: i32) -> (i32, i32) {
    %c0_i32 = arith.constant 0 : i32
    %c0_i32_0 = arith.constant 0 : i32
    return %arg0, %c0_i32 : i32, i32
  }
  func.func @transform_1(%arg0: i32) -> (i32, i32) {
    %c0_i32 = arith.constant 0 : i32
    %c0_i32_0 = arith.constant 0 : i32
    %c0_i32_1 = arith.constant 0 : i32
    return %c0_i32, %c0_i32_0 : i32, i32
  }
  func.func @transform_2(%arg0: i32) -> (i32, i32) {
    %c0_i32 = arith.constant 0 : i32
    %c0_i32_0 = arith.constant 0 : i32
    %c0_i32_1 = arith.constant 0 : i32
    return %c0_i32, %c0_i32_0 : i32, i32
  }
  func.func @transform_3(%arg0: i32) -> (i32, i32) {
    %c0_i32 = arith.constant 0 : i32
    %c0_i32_0 = arith.constant 0 : i32
    %c0_i32_1 = arith.constant 0 : i32
    return %c0_i32, %c0_i32_0 : i32, i32
  }
  func.func @transform_4(%arg0: i32) -> (i32, i32) {
    %c0_i32 = arith.constant 0 : i32
    %c0_i32_0 = arith.constant 0 : i32
    %c0_i32_1 = arith.constant 0 : i32
    return %c0_i32, %c0_i32_0 : i32, i32
  }
  func.func @transform_5(%arg0: i32) -> (i32, i32) {
    %c0_i32 = arith.constant 0 : i32
    %c0_i32_0 = arith.constant 0 : i32
    %c0_i32_1 = arith.constant 0 : i32
    return %c0_i32, %c0_i32_0 : i32, i32
  }
  func.func @transform_6(%arg0: i32) -> (i32, i32) {
    %c0_i32 = arith.constant 0 : i32
    %c0_i32_0 = arith.constant 0 : i32
    %c0_i32_1 = arith.constant 0 : i32
    return %c0_i32, %c0_i32_0 : i32, i32
  }
  func.func @transform_7(%arg0: i32) -> (i32, i32) {
    %c0_i32 = arith.constant 0 : i32
    %c0_i32_0 = arith.constant 0 : i32
    return %arg0, %c0_i32 : i32, i32
  }
  func.func @transform_8(%arg0: i32) -> (i32, i32) {
    %c0_i32 = arith.constant 0 : i32
    %c0_i32_0 = arith.constant 0 : i32
    return %arg0, %c0_i32 : i32, i32
  }
}

</mosaic_0001>

<llo_original>
// kernel: _forward.1
$region0: #{_forward.1}
  #allocation0 [shape = 'u32[]', space=smem, size = 0x4, offset = 0x4, fixed_abs, tag = 'smem constant byte address 0x4 - core index']
  #allocation1 [shape = 'u32[72,128]{1,0:T(1,128)}', space=vmem, size = 0x9000, scoped, tag = 'internal scratch']
  %s0 = inlined_call_operand.hbm [shape: f32[64,200], index: 0, kind: input, shape index: {}]
  %s1 = inlined_call_operand.hbm [shape: f32[200,128], index: 1, kind: input, shape index: {}]
  %s2 = inlined_call_operand.vmem [shape: f32[1,128], index: 2, kind: input, shape index: {}]
  %s3 = inlined_call_operand.hbm [shape: f32[128,128], index: 3, kind: input, shape index: {}]
  %s4 = inlined_call_operand.vmem [shape: f32[1,128], index: 4, kind: input, shape index: {}]
  %s5 = inlined_call_operand.hbm [shape: f32[128,128], index: 5, kind: input, shape index: {}]
  %s6 = inlined_call_operand.vmem [shape: f32[1,128], index: 6, kind: input, shape index: {}]
  %s7 = inlined_call_operand.hbm [shape: f32[64,128], index: 7, kind: output, shape index: {0}]
  %s8 = inlined_call_operand.hbm [shape: f32[64,128], index: 8, kind: output, shape index: {1}]
  %9 = xla_tuple %s7, %s8
  %s10 = sld [smem:[#allocation0]]
  $region62: #{_forward.1} parent=0
    _
  %s12 = ssub.s32 1, %s10
  %s13 = scalar_select 0, %s12, %s10
  $region1: #{_forward.1} parent=0
    #allocation2 [shape = 'u8[65536]{0}', space=vmem, size = 0x10000, scoped, tag = 'input window, operand 0, single buffered']
    #allocation3 [shape = 's32[1]{0}', space=sflag, size = 0x4, scoped, tag = 'scoped memory for _forward.1']
    #allocation4 [shape = 's32[1]{0}', space=sflag, size = 0x4, scoped, tag = 'scoped memory for _forward.1']
    #allocation5 [shape = 'u8[102400]{0}', space=vmem, size = 0x19000, scoped, tag = 'input window, operand 1, single buffered']
    #allocation6 [shape = 's32[1]{0}', space=sflag, size = 0x4, scoped, tag = 'scoped memory for _forward.1']
    #allocation7 [shape = 'u8[65536]{0}', space=vmem, size = 0x10000, scoped, tag = 'input window, operand 3, single buffered']
    #allocation8 [shape = 'u8[65536]{0}', space=vmem, size = 0x10000, scoped, tag = 'input window, operand 5, single buffered']
    #allocation9 [shape = 's32[1]{0}', space=sflag, size = 0x4, scoped, tag = 'scoped memory for _forward.1']
    #allocation10 [shape = 'u8[32768]{0}', space=vmem, size = 0x8000, scoped, tag = 'output window, operand 0, single buffered']
    #allocation11 [shape = 'u8[32768]{0}', space=vmem, size = 0x8000, scoped, tag = 'output window, operand 1, single buffered']
    #allocation12 [shape = 's32[1]{0}', space=sflag, size = 0x4, scoped, tag = 'scoped memory for _forward.1']
    %14 = vsyncpa [#allocation3], 0
    %15 = vsyncpa [#allocation6], 0
    %16 = vsyncpa [#allocation9], 0
    %17 = vsyncpa [#allocation4], 0
    %18 = vsyncpa [#allocation12], 0
    // Predicated region
    $region2: #{_forward.1} parent=1 // pred_check
      _
    $region3: #{_forward.1} parent=1 // pred_check_branch
      %20 = sbr.rel (0) target = $region5
    $region4: #{_forward.1} parent=1 // pred_region
      %22 = vsyncadd [#allocation3], 0
      %s23 = sshll.u32 %s0, 4
      %s24 = int_to_ptr.hbm [resolvable:$true] %s23
      %s25 = sshll.u32 [#allocation2], 4
      %s26 = int_to_ptr.vmem [resolvable:$true] %s25
      %31 = dma.hbm_to_vmem [thread:$0]  %s24, 2048, %s26, [#allocation3], 256, 256, 16
    $region5: #{_forward.1} parent=1 // pred_fallthru
      _
    // Predicated region
    $region6: #{_forward.1} parent=1 // pred_check
      _
    $region7: #{_forward.1} parent=1 // pred_check_branch
      %33 = sbr.rel (0) target = $region9
    $region8: #{_forward.1} parent=1 // pred_region
      %35 = vsyncadd [#allocation6], 0
      %s36 = sshll.u32 %s1, 4
      %s37 = int_to_ptr.hbm [resolvable:$true] %s36
      %s38 = sshll.u32 [#allocation5], 4
      %s39 = int_to_ptr.vmem [resolvable:$true] %s38
      %44 = dma.hbm_to_vmem [thread:$0]  %s37, 3200, %s39, [#allocation6], 128, 128, 8
    $region9: #{_forward.1} parent=1 // pred_fallthru
      _
    // Predicated region
    $region10: #{_forward.1} parent=1 // pred_check
      _
    $region11: #{_forward.1} parent=1 // pred_check_branch
      %46 = sbr.rel (0) target = $region13
    $region12: #{_forward.1} parent=1 // pred_region
      _
    $region13: #{_forward.1} parent=1 // pred_fallthru
      _
    // Predicated region
    $region14: #{_forward.1} parent=1 // pred_check
      _
    $region15: #{_forward.1} parent=1 // pred_check_branch
      %48 = sbr.rel (0) target = $region17
    $region16: #{_forward.1} parent=1 // pred_region
      %50 = vsyncadd [#allocation6], 0
      %s51 = sshll.u32 %s3, 4
      %s52 = int_to_ptr.hbm [resolvable:$true] %s51
      %s53 = sshll.u32 [#allocation7], 4
      %s54 = int_to_ptr.vmem [resolvable:$true] %s53
      %59 = dma.hbm_to_vmem [thread:$0]  %s52, 2048, %s54, [#allocation6], 128, 128, 8
    $region17: #{_forward.1} parent=1 // pred_fallthru
      _
    // Predicated region
    $region18: #{_forward.1} parent=1 // pred_check
      _
    $region19: #{_forward.1} parent=1 // pred_check_branch
      %61 = sbr.rel (0) target = $region21
    $region20: #{_forward.1} parent=1 // pred_region
      _
    $region21: #{_forward.1} parent=1 // pred_fallthru
      _
    // Predicated region
    $region22: #{_forward.1} parent=1 // pred_check
      _
    $region23: #{_forward.1} parent=1 // pred_check_branch
      %63 = sbr.rel (0) target = $region25
    $region24: #{_forward.1} parent=1 // pred_region
      %65 = vsyncadd [#allocation9], 0
      %s66 = sshll.u32 %s5, 4
      %s67 = int_to_ptr.hbm [resolvable:$true] %s66
      %s68 = sshll.u32 [#allocation8], 4
      %s69 = int_to_ptr.vmem [resolvable:$true] %s68
      %74 = dma.hbm_to_vmem [thread:$0]  %s67, 2048, %s69, [#allocation9], 128, 128, 8
    $region25: #{_forward.1} parent=1 // pred_fallthru
      _
    // Predicated region
    $region26: #{_forward.1} parent=1 // pred_check
      _
    $region27: #{_forward.1} parent=1 // pred_check_branch
      %76 = sbr.rel (0) target = $region29
    $region28: #{_forward.1} parent=1 // pred_region
      _
    $region29: #{_forward.1} parent=1 // pred_fallthru
      _
    // Predicated region
    $region30: #{_forward.1} parent=1 // pred_check
      _
    $region31: #{_forward.1} parent=1 // pred_check_branch
      %78 = sbr.rel (0) target = $region33
    $region32: #{_forward.1} parent=1 // pred_region
      %80 = dma.done [#allocation3], 2048
    $region33: #{_forward.1} parent=1 // pred_fallthru
      _
    // Predicated region
    $region34: #{_forward.1} parent=1 // pred_check
      _
    $region35: #{_forward.1} parent=1 // pred_check_branch
      %82 = sbr.rel (0) target = $region37
    $region36: #{_forward.1} parent=1 // pred_region
      %84 = dma.done [#allocation6], 3200
    $region37: #{_forward.1} parent=1 // pred_fallthru
      _
    // Predicated region
    $region38: #{_forward.1} parent=1 // pred_check
      _
    $region39: #{_forward.1} parent=1 // pred_check_branch
      %86 = sbr.rel (0) target = $region41
    $region40: #{_forward.1} parent=1 // pred_region
      %88 = dma.done [#allocation6], 2048
    $region41: #{_forward.1} parent=1 // pred_fallthru
      _
    // Predicated region
    $region42: #{_forward.1} parent=1 // pred_check
      _
    $region43: #{_forward.1} parent=1 // pred_check_branch
      %90 = sbr.rel (0) target = $region45
    $region44: #{_forward.1} parent=1 // pred_region
      %92 = dma.done [#allocation9], 2048
    $region45: #{_forward.1} parent=1 // pred_fallthru
      _
    %v93 = vld [vmem:[#allocation2] sm:$0xff]
    %v94 = vld [vmem:[#allocation2 + $0x8] sm:$0xff]
    %v95 = vld [vmem:[#allocation2 + $0x10] sm:$0xff]
    %v96 = vld [vmem:[#allocation2 + $0x18] sm:$0xff]
    %v97 = vld [vmem:[#allocation2 + $0x20] sm:$0xff]
    %v98 = vld [vmem:[#allocation2 + $0x28] sm:$0xff]
    %v99 = vld [vmem:[#allocation2 + $0x30] sm:$0xff]
    %v100 = vld [vmem:[#allocation2 + $0x38] sm:$0xff]
    %v101 = vld [vmem:[#allocation2 + $0x40] sm:$0xff]
    %v102 = vld [vmem:[#allocation2 + $0x48] sm:$0xff]
    %v103 = vld [vmem:[#allocation2 + $0x50] sm:$0xff]
    %v104 = vld [vmem:[#allocation2 + $0x58] sm:$0xff]
    %v105 = vld [vmem:[#allocation2 + $0x60] sm:$0xff]
    %v106 = vld [vmem:[#allocation2 + $0x68] sm:$0xff]
    %v107 = vld [vmem:[#allocation2 + $0x70] sm:$0xff]
    %v108 = vld [vmem:[#allocation2 + $0x78] sm:$0xff]
    %v109 = vld [vmem:[#allocation5] sm:$0xff]
    %v110 = vld [vmem:[#allocation5 + $0x8] sm:$0xff]
    %v111 = vld [vmem:[#allocation5 + $0x10] sm:$0xff]
    %v112 = vld [vmem:[#allocation5 + $0x18] sm:$0xff]
    %v113 = vld [vmem:[#allocation5 + $0x20] sm:$0xff]
    %v114 = vld [vmem:[#allocation5 + $0x28] sm:$0xff]
    %v115 = vld [vmem:[#allocation5 + $0x30] sm:$0xff]
    %v116 = vld [vmem:[#allocation5 + $0x38] sm:$0xff]
    %v117 = vld [vmem:[#allocation5 + $0x40] sm:$0xff]
    %v118 = vld [vmem:[#allocation5 + $0x48] sm:$0xff]
    %v119 = vld [vmem:[#allocation5 + $0x50] sm:$0xff]
    %v120 = vld [vmem:[#allocation5 + $0x58] sm:$0xff]
    %v121 = vld [vmem:[#allocation5 + $0x60] sm:$0xff]
    %v122 = vld [vmem:[#allocation5 + $0x68] sm:$0xff]
    %v123 = vld [vmem:[#allocation5 + $0x70] sm:$0xff]
    %v124 = vld [vmem:[#allocation5 + $0x78] sm:$0xff]
    %v125 = vld [vmem:[#allocation5 + $0x80] sm:$0xff]
    %v126 = vld [vmem:[#allocation5 + $0x88] sm:$0xff]
    %v127 = vld [vmem:[#allocation5 + $0x90] sm:$0xff]
    %v128 = vld [vmem:[#allocation5 + $0x98] sm:$0xff]
    %v129 = vld [vmem:[#allocation5 + $0xa0] sm:$0xff]
    %v130 = vld [vmem:[#allocation5 + $0xa8] sm:$0xff]
    %v131 = vld [vmem:[#allocation5 + $0xb0] sm:$0xff]
    %v132 = vld [vmem:[#allocation5 + $0xb8] sm:$0xff]
    %v133 = vld [vmem:[#allocation5 + $0xc0] sm:$0xff]
    %v134 = vld [vmem:[%s2] sm:$0x1]
    %v136 = vperm.slane %v134, 0
    %vm138 = vcmask 588800
    %v140 = vsel %vm138, %v94, 0
    %v143 = vsel %vm138, %v96, 0
    %v146 = vsel %vm138, %v98, 0
    %v149 = vsel %vm138, %v100, 0
    %v152 = vsel %vm138, %v102, 0
    %v155 = vsel %vm138, %v104, 0
    %v158 = vsel %vm138, %v106, 0
    %v161 = vsel %vm138, %v108, 0
    %163 = vmatpush.msra.mxu0 %v124
    %164 = vmatpush.msra.mxu0 %v123
    %165 = vmatpush.msra.mxu0 %v122
    %166 = vmatpush.msra.mxu0 %v121
    %167 = vmatpush.msra.mxu0 %v120
    %168 = vmatpush.msra.mxu0 %v119
    %169 = vmatpush.msra.mxu0 %v118
    %170 = vmatpush.msra.mxu0 %v117
    %171 = vmatpush.msra.mxu0 %v116
    %172 = vmatpush.msra.mxu0 %v115
    %173 = vmatpush.msra.mxu0 %v114
    %174 = vmatpush.msra.mxu0 %v113
    %175 = vmatpush.msra.mxu0 %v112
    %176 = vmatpush.msra.mxu0 %v111
    %177 = vmatpush.msra.mxu0 %v110
    %178 = vmatpush.msra.mxu0 %v109
    %179 = vmatmul.f32.gmra.mxu0 %v93
    %v180 = vpop.f32.mrf.mxu0
    %v181 = vadd.f32 %v136, %v180
    %182 = vmatmul.f32.gmra.mxu0 %v95
    %v183 = vpop.f32.mrf.mxu0
    %v184 = vadd.f32 %v136, %v183
    %185 = vmatmul.f32.gmra.mxu0 %v97
    %v186 = vpop.f32.mrf.mxu0
    %v187 = vadd.f32 %v136, %v186
    %188 = vmatmul.f32.gmra.mxu0 %v99
    %v189 = vpop.f32.mrf.mxu0
    %v190 = vadd.f32 %v136, %v189
    %191 = vmatmul.f32.gmra.mxu0 %v101
    %v192 = vpop.f32.mrf.mxu0
    %v193 = vadd.f32 %v136, %v192
    %194 = vmatmul.f32.gmra.mxu0 %v103
    %v195 = vpop.f32.mrf.mxu0
    %v196 = vadd.f32 %v136, %v195
    %197 = vmatmul.f32.gmra.mxu0 %v105
    %v198 = vpop.f32.mrf.mxu0
    %v199 = vadd.f32 %v136, %v198
    %200 = vmatmul.f32.gmra.mxu0 %v107
    %v201 = vpop.f32.mrf.mxu0
    %v202 = vadd.f32 %v136, %v201
    %203 = vdwg.mxu0
    %204 = vmatpush.msra.mxu0 0.0
    %205 = vmatpush.msra.mxu0 0.0
    %206 = vmatpush.msra.mxu0 0.0
    %207 = vmatpush.msra.mxu0 0.0
    %208 = vmatpush.msra.mxu0 0.0
    %209 = vmatpush.msra.mxu0 0.0
    %210 = vmatpush.msra.mxu0 0.0
    %211 = vmatpush.msra.mxu0 %v133
    %212 = vmatpush.msra.mxu0 %v132
    %213 = vmatpush.msra.mxu0 %v131
    %214 = vmatpush.msra.mxu0 %v130
    %215 = vmatpush.msra.mxu0 %v129
    %216 = vmatpush.msra.mxu0 %v128
    %217 = vmatpush.msra.mxu0 %v127
    %218 = vmatpush.msra.mxu0 %v126
    %219 = vmatpush.msra.mxu0 %v125
    %220 = vmatmul.f32.gmra.mxu0 %v140
    %v221 = vpop.f32.mrf.mxu0
    %v222 = vadd.f32 %v181, %v221
    %223 = vmatmul.f32.gmra.mxu0 %v143
    %v224 = vpop.f32.mrf.mxu0
    %v225 = vadd.f32 %v184, %v224
    %226 = vmatmul.f32.gmra.mxu0 %v146
    %v227 = vpop.f32.mrf.mxu0
    %v228 = vadd.f32 %v187, %v227
    %229 = vmatmul.f32.gmra.mxu0 %v149
    %v230 = vpop.f32.mrf.mxu0
    %v231 = vadd.f32 %v190, %v230
    %232 = vmatmul.f32.gmra.mxu0 %v152
    %v233 = vpop.f32.mrf.mxu0
    %v234 = vadd.f32 %v193, %v233
    %235 = vmatmul.f32.gmra.mxu0 %v155
    %v236 = vpop.f32.mrf.mxu0
    %v237 = vadd.f32 %v196, %v236
    %238 = vmatmul.f32.gmra.mxu0 %v158
    %v239 = vpop.f32.mrf.mxu0
    %v240 = vadd.f32 %v199, %v239
    %241 = vmatmul.f32.gmra.mxu0 %v161
    %v242 = vpop.f32.mrf.mxu0
    %v243 = vadd.f32 %v202, %v242
    %244 = vdwg.mxu0
    %v245 = vmax.f32 %v222, 0.0
    %v246 = vmax.f32 %v225, 0.0
    %v247 = vmax.f32 %v228, 0.0
    %v248 = vmax.f32 %v231, 0.0
    %v249 = vmax.f32 %v234, 0.0
    %v250 = vmax.f32 %v237, 0.0
    %v251 = vmax.f32 %v240, 0.0
    %v252 = vmax.f32 %v243, 0.0
    %253 = vst [vmem:[#allocation10] sm:$0xff] %v245
    %254 = vst [vmem:[#allocation10 + $0x8] sm:$0xff] %v246
    %255 = vst [vmem:[#allocation10 + $0x10] sm:$0xff] %v247
    %256 = vst [vmem:[#allocation10 + $0x18] sm:$0xff] %v248
    %257 = vst [vmem:[#allocation10 + $0x20] sm:$0xff] %v249
    %258 = vst [vmem:[#allocation10 + $0x28] sm:$0xff] %v250
    %259 = vst [vmem:[#allocation10 + $0x30] sm:$0xff] %v251
    %260 = vst [vmem:[#allocation10 + $0x38] sm:$0xff] %v252
    %v261 = vld [vmem:[#allocation7] sm:$0xff]
    %v262 = vld [vmem:[#allocation7 + $0x8] sm:$0xff]
    %v263 = vld [vmem:[#allocation7 + $0x10] sm:$0xff]
    %v264 = vld [vmem:[#allocation7 + $0x18] sm:$0xff]
    %v265 = vld [vmem:[#allocation7 + $0x20] sm:$0xff]
    %v266 = vld [vmem:[#allocation7 + $0x28] sm:$0xff]
    %v267 = vld [vmem:[#allocation7 + $0x30] sm:$0xff]
    %v268 = vld [vmem:[#allocation7 + $0x38] sm:$0xff]
    %v269 = vld [vmem:[#allocation7 + $0x40] sm:$0xff]
    %v270 = vld [vmem:[#allocation7 + $0x48] sm:$0xff]
    %v271 = vld [vmem:[#allocation7 + $0x50] sm:$0xff]
    %v272 = vld [vmem:[#allocation7 + $0x58] sm:$0xff]
    %v273 = vld [vmem:[#allocation7 + $0x60] sm:$0xff]
    %v274 = vld [vmem:[#allocation7 + $0x68] sm:$0xff]
    %v275 = vld [vmem:[#allocation7 + $0x70] sm:$0xff]
    %v276 = vld [vmem:[#allocation7 + $0x78] sm:$0xff]
    %v277 = vld [vmem:[%s4] sm:$0x1]
    %v279 = vperm.slane %v277, 0
    %281 = vmatpush.msra.mxu0 %v276
    %282 = vmatpush.msra.mxu0 %v275
    %283 = vmatpush.msra.mxu0 %v274
    %284 = vmatpush.msra.mxu0 %v273
    %285 = vmatpush.msra.mxu0 %v272
    %286 = vmatpush.msra.mxu0 %v271
    %287 = vmatpush.msra.mxu0 %v270
    %288 = vmatpush.msra.mxu0 %v269
    %289 = vmatpush.msra.mxu0 %v268
    %290 = vmatpush.msra.mxu0 %v267
    %291 = vmatpush.msra.mxu0 %v266
    %292 = vmatpush.msra.mxu0 %v265
    %293 = vmatpush.msra.mxu0 %v264
    %294 = vmatpush.msra.mxu0 %v263
    %295 = vmatpush.msra.mxu0 %v262
    %296 = vmatpush.msra.mxu0 %v261
    %297 = vmatmul.f32.gmra.mxu0 %v245
    %v298 = vpop.f32.mrf.mxu0
    %v299 = vadd.f32 %v279, %v298
    %300 = vmatmul.f32.gmra.mxu0 %v246
    %v301 = vpop.f32.mrf.mxu0
    %v302 = vadd.f32 %v279, %v301
    %303 = vmatmul.f32.gmra.mxu0 %v247
    %v304 = vpop.f32.mrf.mxu0
    %v305 = vadd.f32 %v279, %v304
    %306 = vmatmul.f32.gmra.mxu0 %v248
    %v307 = vpop.f32.mrf.mxu0
    %v308 = vadd.f32 %v279, %v307
    %309 = vmatmul.f32.gmra.mxu0 %v249
    %v310 = vpop.f32.mrf.mxu0
    %v311 = vadd.f32 %v279, %v310
    %312 = vmatmul.f32.gmra.mxu0 %v250
    %v313 = vpop.f32.mrf.mxu0
    %v314 = vadd.f32 %v279, %v313
    %315 = vmatmul.f32.gmra.mxu0 %v251
    %v316 = vpop.f32.mrf.mxu0
    %v317 = vadd.f32 %v279, %v316
    %318 = vmatmul.f32.gmra.mxu0 %v252
    %v319 = vpop.f32.mrf.mxu0
    %v320 = vadd.f32 %v279, %v319
    %321 = vdwg.mxu0
    %v322 = vmax.f32 %v299, 0.0
    %v323 = vmax.f32 %v302, 0.0
    %v324 = vmax.f32 %v305, 0.0
    %v325 = vmax.f32 %v308, 0.0
    %v326 = vmax.f32 %v311, 0.0
    %v327 = vmax.f32 %v314, 0.0
    %v328 = vmax.f32 %v317, 0.0
    %v329 = vmax.f32 %v320, 0.0
    %v330 = vld [vmem:[#allocation8] sm:$0xff]
    %v331 = vld [vmem:[#allocation8 + $0x8] sm:$0xff]
    %v332 = vld [vmem:[#allocation8 + $0x10] sm:$0xff]
    %v333 = vld [vmem:[#allocation8 + $0x18] sm:$0xff]
    %v334 = vld [vmem:[#allocation8 + $0x20] sm:$0xff]
    %v335 = vld [vmem:[#allocation8 + $0x28] sm:$0xff]
    %v336 = vld [vmem:[#allocation8 + $0x30] sm:$0xff]
    %v337 = vld [vmem:[#allocation8 + $0x38] sm:$0xff]
    %v338 = vld [vmem:[#allocation8 + $0x40] sm:$0xff]
    %v339 = vld [vmem:[#allocation8 + $0x48] sm:$0xff]
    %v340 = vld [vmem:[#allocation8 + $0x50] sm:$0xff]
    %v341 = vld [vmem:[#allocation8 + $0x58] sm:$0xff]
    %v342 = vld [vmem:[#allocation8 + $0x60] sm:$0xff]
    %v343 = vld [vmem:[#allocation8 + $0x68] sm:$0xff]
    %v344 = vld [vmem:[#allocation8 + $0x70] sm:$0xff]
    %v345 = vld [vmem:[#allocation8 + $0x78] sm:$0xff]
    %v346 = vld [vmem:[%s6] sm:$0x1]
    %v348 = vperm.slane %v346, 0
    %350 = vmatpush.msra.mxu0 %v345
    %351 = vmatpush.msra.mxu0 %v344
    %352 = vmatpush.msra.mxu0 %v343
    %353 = vmatpush.msra.mxu0 %v342
    %354 = vmatpush.msra.mxu0 %v341
    %355 = vmatpush.msra.mxu0 %v340
    %356 = vmatpush.msra.mxu0 %v339
    %357 = vmatpush.msra.mxu0 %v338
    %358 = vmatpush.msra.mxu0 %v337
    %359 = vmatpush.msra.mxu0 %v336
    %360 = vmatpush.msra.mxu0 %v335
    %361 = vmatpush.msra.mxu0 %v334
    %362 = vmatpush.msra.mxu0 %v333
    %363 = vmatpush.msra.mxu0 %v332
    %364 = vmatpush.msra.mxu0 %v331
    %365 = vmatpush.msra.mxu0 %v330
    %366 = vmatmul.f32.gmra.mxu0 %v322
    %v367 = vpop.f32.mrf.mxu0
    %v368 = vadd.f32 %v348, %v367
    %369 = vmatmul.f32.gmra.mxu0 %v323
    %v370 = vpop.f32.mrf.mxu0
    %v371 = vadd.f32 %v348, %v370
    %372 = vmatmul.f32.gmra.mxu0 %v324
    %v373 = vpop.f32.mrf.mxu0
    %v374 = vadd.f32 %v348, %v373
    %375 = vmatmul.f32.gmra.mxu0 %v325
    %v376 = vpop.f32.mrf.mxu0
    %v377 = vadd.f32 %v348, %v376
    %378 = vmatmul.f32.gmra.mxu0 %v326
    %v379 = vpop.f32.mrf.mxu0
    %v380 = vadd.f32 %v348, %v379
    %381 = vmatmul.f32.gmra.mxu0 %v327
    %v382 = vpop.f32.mrf.mxu0
    %v383 = vadd.f32 %v348, %v382
    %384 = vmatmul.f32.gmra.mxu0 %v328
    %v385 = vpop.f32.mrf.mxu0
    %v386 = vadd.f32 %v348, %v385
    %387 = vmatmul.f32.gmra.mxu0 %v329
    %v388 = vpop.f32.mrf.mxu0
    %v389 = vadd.f32 %v348, %v388
    %390 = vdwg.mxu0
    %v391 = vmul.f32 %v368, %v368
    %v392 = vmul.f32 %v371, %v371
    %v393 = vmul.f32 %v374, %v374
    %v394 = vmul.f32 %v377, %v377
    %v395 = vmul.f32 %v380, %v380
    %v396 = vmul.f32 %v383, %v383
    %v397 = vmul.f32 %v386, %v386
    %v398 = vmul.f32 %v389, %v389
    %399 = vadd.xlane.f32.xlu0 %v391
    %v400 = vpop.xlane.xlu0 %399
    %401 = vadd.xlane.f32.xlu0 %v392
    %v402 = vpop.xlane.xlu0 %401
    %403 = vadd.xlane.f32.xlu0 %v393
    %v404 = vpop.xlane.xlu0 %403
    %405 = vadd.xlane.f32.xlu0 %v394
    %v406 = vpop.xlane.xlu0 %405
    %407 = vadd.xlane.f32.xlu0 %v395
    %v408 = vpop.xlane.xlu0 %407
    %409 = vadd.xlane.f32.xlu0 %v396
    %v410 = vpop.xlane.xlu0 %409
    %411 = vadd.xlane.f32.xlu0 %v397
    %v412 = vpop.xlane.xlu0 %411
    %413 = vadd.xlane.f32.xlu0 %v398
    %v414 = vpop.xlane.xlu0 %413
    %v415 = vmax.f32 %v400, 1e-24
    %v416 = vmax.f32 %v402, 1e-24
    %v417 = vmax.f32 %v404, 1e-24
    %v418 = vmax.f32 %v406, 1e-24
    %v419 = vmax.f32 %v408, 1e-24
    %v420 = vmax.f32 %v410, 1e-24
    %v421 = vmax.f32 %v412, 1e-24
    %v422 = vmax.f32 %v414, 1e-24
    %v423 = vrsqrt.pop %v415
    %v424 = vmul.f32 %v423, %v415
    %v425 = vmul.f32 %v424, %v423
    %v426 = vmul.f32 0.5, %v425
    %v427 = vsub.f32 1.5, %v426
    %v428 = vmul.f32 %v423, %v427
    %vm429 = vweird.f32 %v415
    %vm430 = vweird.f32 %v423
    %vm431 = vmor %vm429, %vm430
    %v432 = vsel %vm431, %v423, %v428
    %v433 = vrsqrt.pop %v416
    %v434 = vmul.f32 %v433, %v416
    %v435 = vmul.f32 %v434, %v433
    %v436 = vmul.f32 0.5, %v435
    %v437 = vsub.f32 1.5, %v436
    %v438 = vmul.f32 %v433, %v437
    %vm439 = vweird.f32 %v416
    %vm440 = vweird.f32 %v433
    %vm441 = vmor %vm439, %vm440
    %v442 = vsel %vm441, %v433, %v438
    %v443 = vrsqrt.pop %v417
    %v444 = vmul.f32 %v443, %v417
    %v445 = vmul.f32 %v444, %v443
    %v446 = vmul.f32 0.5, %v445
    %v447 = vsub.f32 1.5, %v446
    %v448 = vmul.f32 %v443, %v447
    %vm449 = vweird.f32 %v417
    %vm450 = vweird.f32 %v443
    %vm451 = vmor %vm449, %vm450
    %v452 = vsel %vm451, %v443, %v448
    %v453 = vrsqrt.pop %v418
    %v454 = vmul.f32 %v453, %v418
    %v455 = vmul.f32 %v454, %v453
    %v456 = vmul.f32 0.5, %v455
    %v457 = vsub.f32 1.5, %v456
    %v458 = vmul.f32 %v453, %v457
    %vm459 = vweird.f32 %v418
    %vm460 = vweird.f32 %v453
    %vm461 = vmor %vm459, %vm460
    %v462 = vsel %vm461, %v453, %v458
    %v463 = vrsqrt.pop %v419
    %v464 = vmul.f32 %v463, %v419
    %v465 = vmul.f32 %v464, %v463
    %v466 = vmul.f32 0.5, %v465
    %v467 = vsub.f32 1.5, %v466
    %v468 = vmul.f32 %v463, %v467
    %vm469 = vweird.f32 %v419
    %vm470 = vweird.f32 %v463
    %vm471 = vmor %vm469, %vm470
    %v472 = vsel %vm471, %v463, %v468
    %v473 = vrsqrt.pop %v420
    %v474 = vmul.f32 %v473, %v420
    %v475 = vmul.f32 %v474, %v473
    %v476 = vmul.f32 0.5, %v475
    %v477 = vsub.f32 1.5, %v476
    %v478 = vmul.f32 %v473, %v477
    %vm479 = vweird.f32 %v420
    %vm480 = vweird.f32 %v473
    %vm481 = vmor %vm479, %vm480
    %v482 = vsel %vm481, %v473, %v478
    %v483 = vrsqrt.pop %v421
    %v484 = vmul.f32 %v483, %v421
    %v485 = vmul.f32 %v484, %v483
    %v486 = vmul.f32 0.5, %v485
    %v487 = vsub.f32 1.5, %v486
    %v488 = vmul.f32 %v483, %v487
    %vm489 = vweird.f32 %v421
    %vm490 = vweird.f32 %v483
    %vm491 = vmor %vm489, %vm490
    %v492 = vsel %vm491, %v483, %v488
    %v493 = vrsqrt.pop %v422
    %v494 = vmul.f32 %v493, %v422
    %v495 = vmul.f32 %v494, %v493
    %v496 = vmul.f32 0.5, %v495
    %v497 = vsub.f32 1.5, %v496
    %v498 = vmul.f32 %v493, %v497
    %vm499 = vweird.f32 %v422
    %vm500 = vweird.f32 %v493
    %vm501 = vmor %vm499, %vm500
    %v502 = vsel %vm501, %v493, %v498
    %v503 = vmul.f32 %v368, %v432
    %v504 = vmul.f32 %v371, %v442
    %v505 = vmul.f32 %v374, %v452
    %v506 = vmul.f32 %v377, %v462
    %v507 = vmul.f32 %v380, %v472
    %v508 = vmul.f32 %v383, %v482
    %v509 = vmul.f32 %v386, %v492
    %v510 = vmul.f32 %v389, %v502
    %511 = vst [vmem:[#allocation11] sm:$0xff] %v503
    %512 = vst [vmem:[#allocation11 + $0x8] sm:$0xff] %v504
    %513 = vst [vmem:[#allocation11 + $0x10] sm:$0xff] %v505
    %514 = vst [vmem:[#allocation11 + $0x18] sm:$0xff] %v506
    %515 = vst [vmem:[#allocation11 + $0x20] sm:$0xff] %v507
    %516 = vst [vmem:[#allocation11 + $0x28] sm:$0xff] %v508
    %517 = vst [vmem:[#allocation11 + $0x30] sm:$0xff] %v509
    %518 = vst [vmem:[#allocation11 + $0x38] sm:$0xff] %v510
    // Predicated region
    $region46: #{_forward.1} parent=1 // pred_check
      _
    $region47: #{_forward.1} parent=1 // pred_check_branch
      %520 = sbr.rel (0) target = $region49
    $region48: #{_forward.1} parent=1 // pred_region
      %522 = vsyncadd [#allocation4], 0
      %s523 = sshll.u32 [#allocation10], 4
      %s524 = int_to_ptr.vmem [resolvable:$true] %s523
      %s525 = sshll.u32 %s7, 4
      %s526 = int_to_ptr.hbm [resolvable:$true] %s525
      %531 = dma.vmem_to_hbm [thread:$0]  %s524, 1024, %s526, [#allocation4], 128, 128, 8
    $region49: #{_forward.1} parent=1 // pred_fallthru
      _
    // Predicated region
    $region50: #{_forward.1} parent=1 // pred_check
      _
    $region51: #{_forward.1} parent=1 // pred_check_branch
      %533 = sbr.rel (0) target = $region53
    $region52: #{_forward.1} parent=1 // pred_region
      %535 = vsyncadd [#allocation12], 0
      %s536 = sshll.u32 [#allocation11], 4
      %s537 = int_to_ptr.vmem [resolvable:$true] %s536
      %s538 = sshll.u32 %s8, 4
      %s539 = int_to_ptr.hbm [resolvable:$true] %s538
      %544 = dma.vmem_to_hbm [thread:$0]  %s537, 1024, %s539, [#allocation12], 128, 128, 8
    $region53: #{_forward.1} parent=1 // pred_fallthru
      _
    // Predicated region
    $region54: #{_forward.1} parent=1 // pred_check
      _
    $region55: #{_forward.1} parent=1 // pred_check_branch
      %546 = sbr.rel (0) target = $region57
    $region56: #{_forward.1} parent=1 // pred_region
      %548 = dma.done [#allocation4], 1024
    $region57: #{_forward.1} parent=1 // pred_fallthru
      _
    // Predicated region
    $region58: #{_forward.1} parent=1 // pred_check
      _
    $region59: #{_forward.1} parent=1 // pred_check_branch
      %550 = sbr.rel (0) target = $region61
    $region60: #{_forward.1} parent=1 // pred_region
      %552 = dma.done [#allocation12], 1024
    $region61: #{_forward.1} parent=1 // pred_fallthru
      _
    %553 = vsyncpa [#allocation3], 1
    %554 = vsyncpa [#allocation6], 1
    %555 = vsyncpa [#allocation9], 1
    %556 = vsyncpa [#allocation4], 1
    %557 = vsyncpa [#allocation12], 1

</llo_original>
